<compile_context>
chip_gen: v7x
topology: tpu7x:2x2x1
jax: 0.10.0
libtpu: 0.0.40
codegen_flags: <defaults>
</compile_context>

<pallas_src>
import functools

import jax
import jax.numpy as jnp
from jax import lax
from jax.experimental import pallas as pl
from jax.experimental.pallas import tpu as pltpu


def _round_up(x, m):
    return ((x + m - 1) // m) * m


def _clop_cosine_kernel(z_i_ref, z_j_ref, labels_ref, anchors_ref, out_ref,
                        acc_ref, *, lambda_value, num_classes):
    # Tiles arrive in native dtype; upcast in-VMEM (keeps HBM->VMEM DMA narrow).
    zi = z_i_ref[...].astype(jnp.float32)            # (TB, D)
    zj = z_j_ref[...].astype(jnp.float32)            # (TB, D)
    labels = labels_ref[...]                         # (TB, 1) int32
    anchors = anchors_ref[...].astype(jnp.float32)   # (C, D)

    # torch.nn.functional.normalize: x / max(||x||, eps) == x * rsqrt(max(||x||^2, eps^2)).
    # rsqrt goes to the EUP slot; avoids f32 sqrt + divide on the VALU.
    eps2 = 1e-24
    zi_n = zi * lax.rsqrt(jnp.maximum(jnp.sum(zi * zi, axis=1, keepdims=True), eps2))
    zj_n = zj * lax.rsqrt(jnp.maximum(jnp.sum(zj * zj, axis=1, keepdims=True), eps2))

    # Fused cosine terms: <zi_n, a> + <zj_n, a> == <zi_n + zj_n, a>.
    s = zi_n + zj_n                                  # (TB, D)

    # Contract over D on the MXU, then select each row's own class column.
    logits = lax.dot_general(
        s, anchors, dimension_numbers=(((1,), (1,)), ((), ())),
        preferred_element_type=jnp.float32)          # (TB, C)

    tb = logits.shape[0]
    class_iota = lax.broadcasted_iota(jnp.int32, (tb, num_classes), 1)
    sel = labels == class_iota                       # label == -1 selects nothing
    cos = 0.5 * jnp.sum(jnp.where(sel, logits, 0.0), axis=1, keepdims=True)  # (TB, 1)

    validf = (labels != -1).astype(jnp.float32)      # (TB, 1)
    tile_loss = jnp.sum((1.0 - cos) * validf)
    tile_count = jnp.sum(validf)

    @pl.when(pl.program_id(0) == 0)
    def _init():
        acc_ref[0] = jnp.float32(0.0)
        acc_ref[1] = jnp.float32(0.0)

    acc_ref[0] = acc_ref[0] + tile_loss
    acc_ref[1] = acc_ref[1] + tile_count

    @pl.when(pl.program_id(0) == pl.num_programs(0) - 1)
    def _finalize():
        cnt = acc_ref[1]
        # no valid labels -> 0.0 (matches the torch early-return)
        loss = jnp.where(cnt > 0.0, acc_ref[0] / jnp.maximum(cnt, 1.0), 0.0)
        out_ref[0, 0] = loss * lambda_value


def clop_loss_cosine(z_i, z_j, labels, anchors, lambda_value=1.0,
                     block_rows=256):
    """Pallas implementation of CLOPLoss.forward with distance='cosine'."""
    if labels is None:
        return jnp.float32(0.0)

    b, d = z_i.shape
    c = anchors.shape[0]
    labels2d = labels.reshape(b, 1).astype(jnp.int32)

    # Sublane pack of the embedding dtype: 8 (f32), 16 (bf16/f16), 32 (int8/fp8).
    pack = max(8, 32 // max(1, jnp.dtype(z_i.dtype).itemsize))
    tb = min(block_rows, _round_up(b, pack))
    tb = _round_up(tb, pack)

    # Pad the batch to a multiple of the tile; padded rows get label -1 so they
    # are masked out of the mean exactly like invalid samples.
    b_pad = _round_up(b, tb)
    if b_pad != b:
        pad = b_pad - b
        z_i = jnp.pad(z_i, ((0, pad), (0, 0)))
        z_j = jnp.pad(z_j, ((0, pad), (0, 0)))
        labels2d = jnp.pad(labels2d, ((0, pad), (0, 0)), constant_values=-1)

    grid = (b_pad // tb,)
    kernel = functools.partial(_clop_cosine_kernel,
                               lambda_value=float(lambda_value),
                               num_classes=c)

    out = pl.pallas_call(
        kernel,
        out_shape=jax.ShapeDtypeStruct((1, 1), jnp.float32),
        grid_spec=pltpu.PrefetchScalarGridSpec(
            num_scalar_prefetch=0,
            grid=grid,
            in_specs=[
                pl.BlockSpec((tb, d), lambda i: (i, 0)),   # z_i tile
                pl.BlockSpec((tb, d), lambda i: (i, 0)),   # z_j tile
                pl.BlockSpec((tb, 1), lambda i: (i, 0)),   # labels tile
                pl.BlockSpec((c, d), lambda i: (0, 0)),    # anchors (resident)
            ],
            out_specs=pl.BlockSpec(memory_space=pltpu.MemorySpace.SMEM),
            scratch_shapes=[pltpu.SMEM((2,), jnp.float32)],
        ),
        compiler_params=pltpu.CompilerParams(
            dimension_semantics=("arbitrary",)),
    )(z_i, z_j, labels2d, anchors)
    return out[0, 0]


def _reference_loss(z_i, z_j, labels, anchors, lambda_value=1.0):
    """Pure-JAX mirror of the PyTorch forward (cosine), for verification."""
    eps = 1e-12
    zi = z_i.astype(jnp.float32)
    zj = z_j.astype(jnp.float32)
    zi = zi / jnp.maximum(jnp.linalg.norm(zi, axis=1, keepdims=True), eps)
    zj = zj / jnp.maximum(jnp.linalg.norm(zj, axis=1, keepdims=True), eps)
    valid = labels != -1
    safe = jnp.where(valid, labels, 0)
    a = anchors.astype(jnp.float32)[safe]
    cos = 0.5 * (jnp.sum(zi * a, axis=1) + jnp.sum(zj * a, axis=1))
    vf = valid.astype(jnp.float32)
    cnt = jnp.sum(vf)
    loss = jnp.where(cnt > 0, jnp.sum((1.0 - cos) * vf) / jnp.maximum(cnt, 1.0), 0.0)
    return loss * lambda_value


if __name__ == "__main__":
    num_classes = 10
    embedding_dim = 32
    batch = 8
    lambda_value = 1.0

    key = jax.random.PRNGKey(0)
    k_anchor, k_zi, k_zj, k_lab = jax.random.split(key, 4)

    # Deterministic SVD-initialized anchors (matches torch __init__, etf=False):
    # anchors = V[:, :num_classes].T == Vh[:num_classes, :]
    random_matrix = jax.random.normal(k_anchor, (num_classes, embedding_dim),
                                      dtype=jnp.float32)
    _, _, vh = jnp.linalg.svd(random_matrix, full_matrices=False)
    anchors = vh[:num_classes, :]                     # (C, D)

    z_i = jax.random.normal(k_zi, (batch, embedding_dim), dtype=jnp.float32)
    z_j = jax.random.normal(k_zj, (batch, embedding_dim), dtype=jnp.float32)
    labels = jax.random.randint(k_lab, (batch,), 0, num_classes, dtype=jnp.int32)
    labels = labels.at[1].set(-1)                     # exercise the valid_mask path
    labels = labels.at[5].set(-1)

    loss = jax.block_until_ready(
        clop_loss_cosine(z_i, z_j, labels, anchors, lambda_value))
    ref = _reference_loss(z_i, z_j, labels, anchors, lambda_value)
    assert jnp.allclose(loss, ref, atol=1e-5, rtol=1e-5), (loss, ref)

    # All-invalid path -> 0.0 (matches the torch early-return).
    loss0 = jax.block_until_ready(
        clop_loss_cosine(z_i, z_j, jnp.full((batch,), -1, jnp.int32),
                         anchors, lambda_value))
    assert jnp.allclose(loss0, 0.0, atol=1e-6), loss0

    # Multi-tile accumulator + padding path (batch not a multiple of the tile).
    batch2 = 20
    k_zi2, k_zj2, k_lab2 = jax.random.split(jax.random.PRNGKey(1), 3)
    z_i2 = jax.random.normal(k_zi2, (batch2, embedding_dim), dtype=jnp.float32)
    z_j2 = jax.random.normal(k_zj2, (batch2, embedding_dim), dtype=jnp.float32)
    labels2 = jax.random.randint(k_lab2, (batch2,), 0, num_classes,
                                 dtype=jnp.int32)
    labels2 = labels2.at[3].set(-1)
    loss2 = jax.block_until_ready(
        clop_loss_cosine(z_i2, z_j2, labels2, anchors, lambda_value,
                         block_rows=8))
    ref2 = _reference_loss(z_i2, z_j2, labels2, anchors, lambda_value)
    assert jnp.allclose(loss2, ref2, atol=1e-5, rtol=1e-5), (loss2, ref2)

    # TODO(synk): 'euclidean'/'manhattan' distance variants and the
    # torch.distributed all_reduce are not implemented (single-device, cosine only).
    print("KERNEL_OK")
</pallas_src>

<mosaic_0001>
module attributes {stable_mosaic.version = 11 : i64} {
  func.func @_clop_cosine_kernel(%arg0: i32, %arg1: memref<8x32xf32, #tpu.memory_space<vmem>>, %arg2: memref<8x32xf32, #tpu.memory_space<vmem>>, %arg3: memref<8x1xi32, #tpu.memory_space<vmem>>, %arg4: memref<10x32xf32, #tpu.memory_space<vmem>>, %arg5: memref<1x1xf32, #tpu.memory_space<smem>>, %arg6: memref<2xf32, #tpu.memory_space<smem>>) attributes {dimension_semantics = [#tpu.dimension_semantics<arbitrary>], iteration_bounds = array<i64: 1>, scalar_prefetch = 0 : i64, scratch_operands = 1 : i64, tpu.core_type = #tpu.core_type<tc>, window_params = [{transform_indices = @transform_0, window_bounds = array<i64: 8, 32>}, {transform_indices = @transform_1, window_bounds = array<i64: 8, 32>}, {transform_indices = @transform_2, window_bounds = array<i64: 8, 1>}, {pipeline_mode = #tpu.pipeline_mode<synchronous>, transform_indices = @transform_3, window_bounds = array<i64: 10, 32>}, {transform_indices = @transform_4, window_bounds = array<i64: 1, 1>}]} {
    %c0 = arith.constant 0 : index
    %c0_0 = arith.constant 0 : index
    %0 = vector.load %arg1[%c0, %c0_0] : memref<8x32xf32, #tpu.memory_space<vmem>>, vector<8x32xf32>
    %c0_1 = arith.constant 0 : index
    %c0_2 = arith.constant 0 : index
    %1 = vector.load %arg2[%c0_1, %c0_2] : memref<8x32xf32, #tpu.memory_space<vmem>>, vector<8x32xf32>
    %c0_3 = arith.constant 0 : index
    %c0_4 = arith.constant 0 : index
    %2 = vector.load %arg3[%c0_3, %c0_4] : memref<8x1xi32, #tpu.memory_space<vmem>>, vector<8x1xi32>
    %c0_5 = arith.constant 0 : index
    %c0_6 = arith.constant 0 : index
    %3 = vector.load %arg4[%c0_5, %c0_6] : memref<10x32xf32, #tpu.memory_space<vmem>>, vector<10x32xf32>
    %4 = arith.mulf %0, %0 : vector<8x32xf32>
    %cst = arith.constant dense<0.000000e+00> : vector<8xf32>
    %5 = vector.multi_reduction <add>, %4, %cst [1] : vector<8x32xf32> to vector<8xf32>
    %6 = vector.shape_cast %5 : vector<8xf32> to vector<8x1xf32>
    %cst_7 = arith.constant 1.000000e-24 : f32
    %7 = vector.broadcast %cst_7 : f32 to vector<8x1xf32>
    %8 = arith.maximumf %6, %7 : vector<8x1xf32>
    %9 = math.rsqrt %8 : vector<8x1xf32>
    %10 = vector.broadcast %9 : vector<8x1xf32> to vector<8x32xf32>
    %11 = arith.mulf %0, %10 : vector<8x32xf32>
    %12 = arith.mulf %1, %1 : vector<8x32xf32>
    %cst_8 = arith.constant dense<0.000000e+00> : vector<8xf32>
    %13 = vector.multi_reduction <add>, %12, %cst_8 [1] : vector<8x32xf32> to vector<8xf32>
    %14 = vector.shape_cast %13 : vector<8xf32> to vector<8x1xf32>
    %cst_9 = arith.constant 1.000000e-24 : f32
    %15 = vector.broadcast %cst_9 : f32 to vector<8x1xf32>
    %16 = arith.maximumf %14, %15 : vector<8x1xf32>
    %17 = math.rsqrt %16 : vector<8x1xf32>
    %18 = vector.broadcast %17 : vector<8x1xf32> to vector<8x32xf32>
    %19 = arith.mulf %1, %18 : vector<8x32xf32>
    %20 = arith.addf %11, %19 : vector<8x32xf32>
    %cst_10 = arith.constant dense<0.000000e+00> : vector<8x10xf32>
    %21 = tpu.matmul %20, %3, %cst_10 {dimension_numbers = #tpu.dot_dimension_numbers<[1], [1], [0], [0], [0, 0, 1, 0], [], []>} : vector<8x32xf32>, vector<10x32xf32>, vector<8x10xf32> -> vector<8x10xf32>
    %22 = tpu.iota {dimensions = array<i32: 1>} : vector<8x10xi32>
    %23 = vector.broadcast %2 : vector<8x1xi32> to vector<8x10xi32>
    %24 = arith.cmpi eq, %23, %22 : vector<8x10xi32>
    %cst_11 = arith.constant 0.000000e+00 : f32
    %25 = vector.broadcast %cst_11 : f32 to vector<8x10xf32>
    %26 = arith.select %24, %21, %25 : vector<8x10xi1>, vector<8x10xf32>
    %cst_12 = arith.constant dense<0.000000e+00> : vector<8xf32>
    %27 = vector.multi_reduction <add>, %26, %cst_12 [1] : vector<8x10xf32> to vector<8xf32>
    %28 = vector.shape_cast %27 : vector<8xf32> to vector<8x1xf32>
    %cst_13 = arith.constant 5.000000e-01 : f32
    %29 = vector.broadcast %cst_13 : f32 to vector<8x1xf32>
    %30 = arith.mulf %29, %28 : vector<8x1xf32>
    %c-1_i32 = arith.constant -1 : i32
    %31 = vector.broadcast %c-1_i32 : i32 to vector<8x1xi32>
    %32 = arith.cmpi ne, %2, %31 : vector<8x1xi32>
    %33 = arith.extui %32 : vector<8x1xi1> to vector<8x1xi32>
    %34 = arith.sitofp %33 : vector<8x1xi32> to vector<8x1xf32>
    %cst_14 = arith.constant 1.000000e+00 : f32
    %35 = vector.broadcast %cst_14 : f32 to vector<8x1xf32>
    %36 = arith.subf %35, %30 : vector<8x1xf32>
    %37 = arith.mulf %36, %34 : vector<8x1xf32>
    %38 = vector.shape_cast %37 : vector<8x1xf32> to vector<1x8x1xf32>
    %cst_15 = arith.constant dense<0.000000e+00> : vector<1xf32>
    %39 = vector.multi_reduction <add>, %38, %cst_15 [1, 2] : vector<1x8x1xf32> to vector<1xf32>
    %40 = vector.shape_cast %39 : vector<1xf32> to vector<1x1x1xf32>
    %41 = vector.extract %40[0, 0, 0] : f32 from vector<1x1x1xf32>
    %42 = vector.shape_cast %34 : vector<8x1xf32> to vector<1x8x1xf32>
    %cst_16 = arith.constant dense<0.000000e+00> : vector<1xf32>
    %43 = vector.multi_reduction <add>, %42, %cst_16 [1, 2] : vector<1x8x1xf32> to vector<1xf32>
    %44 = vector.shape_cast %43 : vector<1xf32> to vector<1x1x1xf32>
    %45 = vector.extract %44[0, 0, 0] : f32 from vector<1x1x1xf32>
    %c0_i32 = arith.constant 0 : i32
    %46 = arith.cmpi eq, %arg0, %c0_i32 : i32
    %47 = arith.extui %46 : i1 to i32
    %c0_i32_17 = arith.constant 0 : i32
    %48 = arith.cmpi ne, %47, %c0_i32_17 : i32
    scf.if %48 {
      %cst_23 = arith.constant 0.000000e+00 : f32
      %c0_24 = arith.constant 0 : index
      %58 = memref.load %arg6[%c0_24] : memref<2xf32, #tpu.memory_space<smem>>
      memref.store %cst_23, %arg6[%c0_24] : memref<2xf32, #tpu.memory_space<smem>>
      %cst_25 = arith.constant 0.000000e+00 : f32
      %c1_26 = arith.constant 1 : index
      %59 = memref.load %arg6[%c1_26] : memref<2xf32, #tpu.memory_space<smem>>
      memref.store %cst_25, %arg6[%c1_26] : memref<2xf32, #tpu.memory_space<smem>>
    } else {
    }
    %c0_18 = arith.constant 0 : index
    %49 = memref.load %arg6[%c0_18] : memref<2xf32, #tpu.memory_space<smem>>
    %50 = arith.addf %49, %41 : f32
    %c0_19 = arith.constant 0 : index
    %51 = memref.load %arg6[%c0_19] : memref<2xf32, #tpu.memory_space<smem>>
    memref.store %50, %arg6[%c0_19] : memref<2xf32, #tpu.memory_space<smem>>
    %c1 = arith.constant 1 : index
    %52 = memref.load %arg6[%c1] : memref<2xf32, #tpu.memory_space<smem>>
    %53 = arith.addf %52, %45 : f32
    %c1_20 = arith.constant 1 : index
    %54 = memref.load %arg6[%c1_20] : memref<2xf32, #tpu.memory_space<smem>>
    memref.store %53, %arg6[%c1_20] : memref<2xf32, #tpu.memory_space<smem>>
    %c0_i32_21 = arith.constant 0 : i32
    %55 = arith.cmpi eq, %arg0, %c0_i32_21 : i32
    %56 = arith.extui %55 : i1 to i32
    %c0_i32_22 = arith.constant 0 : i32
    %57 = arith.cmpi ne, %56, %c0_i32_22 : i32
    scf.if %57 {
      %c1_23 = arith.constant 1 : index
      %58 = memref.load %arg6[%c1_23] : memref<2xf32, #tpu.memory_space<smem>>
      %cst_24 = arith.constant 0.000000e+00 : f32
      %59 = arith.cmpf ogt, %58, %cst_24 : f32
      %c0_25 = arith.constant 0 : index
      %60 = memref.load %arg6[%c0_25] : memref<2xf32, #tpu.memory_space<smem>>
      %cst_26 = arith.constant 1.000000e+00 : f32
      %61 = arith.maximumf %58, %cst_26 : f32
      %62 = arith.divf %60, %61 : f32
      %cst_27 = arith.constant 0.000000e+00 : f32
      %63 = arith.select %59, %62, %cst_27 : f32
      %cst_28 = arith.constant 1.000000e+00 : f32
      %64 = arith.mulf %63, %cst_28 : f32
      %c0_29 = arith.constant 0 : index
      %c0_30 = arith.constant 0 : index
      %65 = memref.load %arg5[%c0_29, %c0_30] : memref<1x1xf32, #tpu.memory_space<smem>>
      memref.store %64, %arg5[%c0_29, %c0_30] : memref<1x1xf32, #tpu.memory_space<smem>>
    } else {
    }
    return
  }
  func.func @transform_0(%arg0: i32) -> (i32, i32) {
    %c0_i32 = arith.constant 0 : i32
    %c0_i32_0 = arith.constant 0 : i32
    return %arg0, %c0_i32 : i32, i32
  }
  func.func @transform_1(%arg0: i32) -> (i32, i32) {
    %c0_i32 = arith.constant 0 : i32
    %c0_i32_0 = arith.constant 0 : i32
    return %arg0, %c0_i32 : i32, i32
  }
  func.func @transform_2(%arg0: i32) -> (i32, i32) {
    %c0_i32 = arith.constant 0 : i32
    %c0_i32_0 = arith.constant 0 : i32
    return %arg0, %c0_i32 : i32, i32
  }
  func.func @transform_3(%arg0: i32) -> (i32, i32) {
    %c0_i32 = arith.constant 0 : i32
    %c0_i32_0 = arith.constant 0 : i32
    %c0_i32_1 = arith.constant 0 : i32
    return %c0_i32, %c0_i32_0 : i32, i32
  }
  func.func @transform_4(%arg0: i32) -> (i32, i32) {
    %c0_i32 = arith.constant 0 : i32
    %c0_i32_0 = arith.constant 0 : i32
    %c0_i32_1 = arith.constant 0 : i32
    return %c0_i32, %c0_i32_0 : i32, i32
  }
}

</mosaic_0001>

<llo_original>
// kernel: tpu_custom_call.1
$region0: #{tpu_custom_call.1}
  #allocation0 [shape = 'u32[]', space=smem, size = 0x4, offset = 0x4, fixed_abs, tag = 'smem constant byte address 0x4 - core index']
  #allocation1 [shape = 'u32[144,128]{1,0:T(1,128)}', space=vmem, size = 0x12000, scoped, tag = 'internal scratch']
  #allocation2 [shape = 'f32[2]{0:T(128)}', space=smem, size = 0x200, scoped, tag = 'scratch operand']
  %s0 = inlined_call_operand.hbm [shape: f32[8,32], index: 0, kind: input, shape index: {}]
  %s1 = inlined_call_operand.hbm [shape: f32[8,32], index: 1, kind: input, shape index: {}]
  %s2 = inlined_call_operand.vmem [shape: s32[8,1], index: 2, kind: input, shape index: {}]
  %s3 = inlined_call_operand.vmem [shape: f32[10,32], index: 3, kind: input, shape index: {}]
  %s4 = inlined_call_operand.hbm [shape: f32[1,1], index: 4, kind: output, shape index: {}]
  %s5 = sld [smem:[#allocation0]]
  $region42: #{tpu_custom_call.1} parent=0
    _
  %s7 = ssub.s32 1, %s5
  %s8 = scalar_select 0, %s7, %s5
  $region1: #{tpu_custom_call.1} parent=0
    #allocation3 [shape = 'u8[4096]{0}', space=vmem, size = 0x1000, scoped, tag = 'input window, operand 0, single buffered']
    #allocation4 [shape = 's32[1]{0}', space=sflag, size = 0x4, scoped, tag = 'scoped memory for tpu_custom_call.1']
    #allocation5 [shape = 's32[1]{0}', space=sflag, size = 0x4, scoped, tag = 'scoped memory for tpu_custom_call.1']
    #allocation6 [shape = 'u8[4096]{0}', space=vmem, size = 0x1000, scoped, tag = 'input window, operand 1, single buffered']
    #allocation7 [shape = 's32[1]{0}', space=sflag, size = 0x4, scoped, tag = 'scoped memory for tpu_custom_call.1']
    #allocation8 [shape = 'u8[512]{0}', space=smem, size = 0x200, scoped, tag = 'output window, operand 0, single buffered']
    %9 = vsyncpa [#allocation4], 0
    %10 = vsyncpa [#allocation7], 0
    %11 = vsyncpa [#allocation5], 0
    // Predicated region
    $region2: #{tpu_custom_call.1} parent=1 // pred_check
      _
    $region3: #{tpu_custom_call.1} parent=1 // pred_check_branch
      %13 = sbr.rel (0) target = $region5
    $region4: #{tpu_custom_call.1} parent=1 // pred_region
      %s15 = ssub.s32 128, 128
      %16 = vsyncadd [#allocation4], %s15
      %s18 = sshll.u32 [#allocation3], 4
      %s19 = int_to_ptr.vmem [resolvable:$true] %s18
      %21 = dma.hbm_to_vmem [thread:$0]  %s0, 128, %s19, [#allocation4]
    $region5: #{tpu_custom_call.1} parent=1 // pred_fallthru
      _
    // Predicated region
    $region6: #{tpu_custom_call.1} parent=1 // pred_check
      _
    $region7: #{tpu_custom_call.1} parent=1 // pred_check_branch
      %23 = sbr.rel (0) target = $region9
    $region8: #{tpu_custom_call.1} parent=1 // pred_region
      %s25 = ssub.s32 128, 128
      %26 = vsyncadd [#allocation7], %s25
      %s28 = sshll.u32 [#allocation6], 4
      %s29 = int_to_ptr.vmem [resolvable:$true] %s28
      %31 = dma.hbm_to_vmem [thread:$0]  %s1, 128, %s29, [#allocation7]
    $region9: #{tpu_custom_call.1} parent=1 // pred_fallthru
      _
    // Predicated region
    $region10: #{tpu_custom_call.1} parent=1 // pred_check
      _
    $region11: #{tpu_custom_call.1} parent=1 // pred_check_branch
      %33 = sbr.rel (0) target = $region13
    $region12: #{tpu_custom_call.1} parent=1 // pred_region
      _
    $region13: #{tpu_custom_call.1} parent=1 // pred_fallthru
      _
    // Predicated region
    $region14: #{tpu_custom_call.1} parent=1 // pred_check
      _
    $region15: #{tpu_custom_call.1} parent=1 // pred_check_branch
      %35 = sbr.rel (0) target = $region17
    $region16: #{tpu_custom_call.1} parent=1 // pred_region
      _
    $region17: #{tpu_custom_call.1} parent=1 // pred_fallthru
      _
    // Predicated region
    $region18: #{tpu_custom_call.1} parent=1 // pred_check
      _
    $region19: #{tpu_custom_call.1} parent=1 // pred_check_branch
      %37 = sbr.rel (0) target = $region21
    $region20: #{tpu_custom_call.1} parent=1 // pred_region
      %38 = dma.done [#allocation4], 128
    $region21: #{tpu_custom_call.1} parent=1 // pred_fallthru
      _
    // Predicated region
    $region22: #{tpu_custom_call.1} parent=1 // pred_check
      _
    $region23: #{tpu_custom_call.1} parent=1 // pred_check_branch
      %40 = sbr.rel (0) target = $region25
    $region24: #{tpu_custom_call.1} parent=1 // pred_region
      %41 = dma.done [#allocation7], 128
    $region25: #{tpu_custom_call.1} parent=1 // pred_fallthru
      _
    %v42 = vld [vmem:[#allocation3] sm:$0xff]
    %v43 = vld [vmem:[#allocation6] sm:$0xff]
    %v44 = vld [vmem:[%s2] sm:$0xff]
    %v45 = vld [vmem:[%s3] sm:$0xff]
    %v46 = vld [vmem:[%s3 + $0x8] sm:$0x3]
    %v47 = vmul.f32 %v42, %v42
    %vm48 = vcmask 261120
    %v49 = vsel %vm48, %v47, 0.0
    %50 = vadd.xlane.f32.xlu0 %v49
    %v51 = vpop.xlane.xlu0 %50
    %v52 = vmax.f32 %v51, 1e-24
    %v53 = vrsqrt.pop %v52
    %v54 = vmul.f32 %v42, %v53
    %v55 = vmul.f32 %v43, %v43
    %v56 = vsel %vm48, %v55, 0.0
    %57 = vadd.xlane.f32.xlu0 %v56
    %v58 = vpop.xlane.xlu0 %57
    %v59 = vmax.f32 %v58, 1e-24
    %v60 = vrsqrt.pop %v59
    %v61 = vmul.f32 %v43, %v60
    %v62 = vadd.f32 %v54, %v61
    %v64 = vsel %vm48, %v62, 0
    %v67 = vsel %vm48, %v45, 0
    %v70 = vsel %vm48, %v46, 0
    %72 = vmatprep.subr.mxu0 0.0
    %73 = vmatpush1.xpose.msra.mxu0 %v67
    %74 = vmatprep.subr.mxu0 0.0
    %75 = vmatpush1.xpose.msra.mxu0 %v70
    %76 = vmatprep.subr.mxu0 0.0
    %77 = vmatpush1.xpose.msra.mxu0 0.0
    %78 = vmatprep.subr.mxu0 0.0
    %79 = vmatpush1.xpose.msra.mxu0 0.0
    %80 = vmatprep.subr.mxu0 0.0
    %81 = vmatpush1.xpose.msra.mxu0 0.0
    %82 = vmatprep.subr.mxu0 0.0
    %83 = vmatpush1.xpose.msra.mxu0 0.0
    %84 = vmatprep.subr.mxu0 0.0
    %85 = vmatpush1.xpose.msra.mxu0 0.0
    %86 = vmatprep.subr.mxu0 0.0
    %87 = vmatpush1.xpose.msra.mxu0 0.0
    %88 = vmatprep.subr.mxu0 0.0
    %89 = vmatpush1.xpose.msra.mxu0 0.0
    %90 = vmatprep.subr.mxu0 0.0
    %91 = vmatpush1.xpose.msra.mxu0 0.0
    %92 = vmatprep.subr.mxu0 0.0
    %93 = vmatpush1.xpose.msra.mxu0 0.0
    %94 = vmatprep.subr.mxu0 0.0
    %95 = vmatpush1.xpose.msra.mxu0 0.0
    %96 = vmatprep.subr.mxu0 0.0
    %97 = vmatpush1.xpose.msra.mxu0 0.0
    %98 = vmatprep.subr.mxu0 0.0
    %99 = vmatpush1.xpose.msra.mxu0 0.0
    %100 = vmatprep.subr.mxu0 0.0
    %101 = vmatpush1.xpose.msra.mxu0 0.0
    %102 = vmatprep.subr.mxu0 0.0
    %103 = vmatpush1.xpose.msra.mxu0 0.0
    %104 = vmatprep.subr.mxu0 0.0
    %105 = vmatpush1.xpose.msra.mxu0 0.0
    %106 = vmatprep.subr.mxu0 0.0
    %107 = vmatpush1.xpose.msra.mxu0 0.0
    %108 = vmatprep.subr.mxu0 0.0
    %109 = vmatpush1.xpose.msra.mxu0 0.0
    %110 = vmatprep.subr.mxu0 0.0
    %111 = vmatpush1.xpose.msra.mxu0 0.0
    %112 = vmatprep.subr.mxu0 0.0
    %113 = vmatpush1.xpose.msra.mxu0 0.0
    %114 = vmatprep.subr.mxu0 0.0
    %115 = vmatpush1.xpose.msra.mxu0 0.0
    %116 = vmatprep.subr.mxu0 0.0
    %117 = vmatpush1.xpose.msra.mxu0 0.0
    %118 = vmatprep.subr.mxu0 0.0
    %119 = vmatpush1.xpose.msra.mxu0 0.0
    %120 = vmatprep.subr.mxu0 0.0
    %121 = vmatpush1.xpose.msra.mxu0 0.0
    %122 = vmatprep.subr.mxu0 0.0
    %123 = vmatpush1.xpose.msra.mxu0 0.0
    %124 = vmatprep.subr.mxu0 0.0
    %125 = vmatpush1.xpose.msra.mxu0 0.0
    %126 = vmatprep.subr.mxu0 0.0
    %127 = vmatpush1.xpose.msra.mxu0 0.0
    %128 = vmatprep.subr.mxu0 0.0
    %129 = vmatpush1.xpose.msra.mxu0 0.0
    %130 = vmatprep.subr.mxu0 0.0
    %131 = vmatpush1.xpose.msra.mxu0 0.0
    %132 = vmatprep.subr.mxu0 0.0
    %133 = vmatpush1.xpose.msra.mxu0 0.0
    %134 = vmatprep.subr.mxu0 0.0
    %135 = vmatpush1.xpose.msra.mxu0 0.0
    %136 = vmatprep.mubr.f32.mxu0 0.0
    %137 = vmatmul.mubr.f32.gmra.mrb[0].mxu0 %v64
    %v138 = vpop.f32.mrb[0].mxu0
    %v139 = vadd.f32 0.0, %v138
    %v140 = vpop.f32.mrb[0].mxu0
    %141 = vdwg.mxu0
    %v142 = vlaneseq
    %v143 = vand.u32 %v142, 127
    %144 = vset.pattern.permute.xlu0 0
    %145 = vperm.xlu0 %144, %v44
    %v146 = vpop.permute.xlu0 %145
    %vm147 = vcmp.eq.s32.totalorder %v146, %v143
    %v148 = vsel %vm147, %v139, 0.0
    %vm149 = vcmask 80896
    %v150 = vsel %vm149, %v148, 0.0
    %151 = vadd.xlane.f32.xlu0 %v150
    %v152 = vpop.xlane.xlu0 %151
    %v153 = vmul.f32 %v152, 0.5
    %vm154 = vcmp.ne.s32.totalorder %v44, 4294967295
    %v155 = vsel %vm154, 1, 0
    %v156 = vcvt.s32.f32 %v155
    %v157 = vsub.f32 1.0, %v153
    %v158 = vmul.f32 %v157, %v156
    %vm159 = vcmask 7168
    %v160 = vsel %vm159, %v158, 0.0
    %161 = vadd.xlane.f32.xlu0 %v160
    %v162 = vpop.xlane.xlu0 %161
    %v163 = vrot.slane %v162, 4
    %v164 = vadd.f32 %v162, %v163
    %v165 = vrot.slane %v164, 2
    %v166 = vadd.f32 %v164, %v165
    %v167 = vrot.slane %v166, 1
    %v168 = vadd.f32 %v166, %v167
    %s169 = vtos %v168
    %v170 = vsel %vm159, %v156, 0.0
    %171 = vadd.xlane.f32.xlu0 %v170
    %v172 = vpop.xlane.xlu0 %171
    %v173 = vrot.slane %v172, 4
    %v174 = vadd.f32 %v172, %v173
    %v175 = vrot.slane %v174, 2
    %v176 = vadd.f32 %v174, %v175
    %v177 = vrot.slane %v176, 1
    %v178 = vadd.f32 %v176, %v177
    %s179 = vtos %v178
    %p180 = scmp.eq.s32.totalorder 0, 0
    // Predicated region
    $region26: #{tpu_custom_call.1} parent=1 // pred_check
      %p181 = pneg %p180
    $region27: #{tpu_custom_call.1} parent=1 // pred_check_branch
      %183 = sbr.rel (%p181) target = $region29
    $region28: #{tpu_custom_call.1} parent=1 // pred_region
      %s184 = scalar_lea.smem [#allocation2], 0
      %185 = sst [smem:[%s184]] 0.0
      %s186 = scalar_lea.smem [#allocation2], 1
      %187 = sst [smem:[%s186]] 0.0
    $region29: #{tpu_custom_call.1} parent=1 // pred_fallthru
      _
    %s188 = sld [smem:[#allocation2]]
    %s189 = sadd.f32 %s188, %s169
    %s190 = scalar_lea.smem [#allocation2], 0
    %191 = sst [smem:[%s190]] %s189
    %s192 = sld [smem:[#allocation2 + $0x1]]
    %s193 = sadd.f32 %s192, %s179
    %s194 = scalar_lea.smem [#allocation2], 1
    %195 = sst [smem:[%s194]] %s193
    // Predicated region
    $region30: #{tpu_custom_call.1} parent=1 // pred_check
      %p196 = pneg %p180
    $region31: #{tpu_custom_call.1} parent=1 // pred_check_branch
      %198 = sbr.rel (%p196) target = $region33
    $region32: #{tpu_custom_call.1} parent=1 // pred_region
      %s199 = sld [smem:[#allocation2 + $0x1]]
      %p200 = scmp.gt.f32.partialorder %s199, 0.0
      %s201 = sld [smem:[#allocation2]]
      %s202 = smax.f32 %s199, 1.0
      %v203 = vstv %s202
      %v204 = vrcp.pop %v203
      %s205 = vtos %v204
      %s206 = smul.f32 %s201, %s205
      %s207 = scalar_select %p200, %s206, 0.0
      %s208 = scalar_lea.smem [#allocation8], 0
      %209 = sst [smem:[%s208]] %s207
    $region33: #{tpu_custom_call.1} parent=1 // pred_fallthru
      _
    // Predicated region
    $region34: #{tpu_custom_call.1} parent=1 // pred_check
      _
    $region35: #{tpu_custom_call.1} parent=1 // pred_check_branch
      %211 = sbr.rel (0) target = $region37
    $region36: #{tpu_custom_call.1} parent=1 // pred_region
      %s213 = ssub.s32 16, 16
      %214 = vsyncadd [#allocation5], %s213
      %217 = dma.smem_to_hbm [#allocation8], 16, %s4, [#allocation5]
    $region37: #{tpu_custom_call.1} parent=1 // pred_fallthru
      _
    // Predicated region
    $region38: #{tpu_custom_call.1} parent=1 // pred_check
      _
    $region39: #{tpu_custom_call.1} parent=1 // pred_check_branch
      %219 = sbr.rel (0) target = $region41
    $region40: #{tpu_custom_call.1} parent=1 // pred_region
      %220 = dma.done [#allocation5], 16
    $region41: #{tpu_custom_call.1} parent=1 // pred_fallthru
      _
    %221 = sfence
    %222 = vsyncpa [#allocation4], 1
    %223 = vsyncpa [#allocation7], 1
    %224 = vsyncpa [#allocation5], 1

</llo_original>
